<compile_context>
chip_gen: v5e
topology: v5e:2x2
jax: 0.10.0
libtpu: 0.0.40
codegen_flags: <defaults>
</compile_context>

<pallas_src>
import jax
import jax.numpy as jnp
from jax.experimental import pallas as pl
from jax.experimental.pallas import tpu as pltpu

# ---- hyperparameters (match TEMILoss.__init__ defaults) ----
BETA = 0.6
MOMENTUM = 0.9
STUDENT_TEMP = 0.1
TEACHER_TEMP = 0.04
GAMMA = 1.0  # sim_weight exponent

INV_STUDENT_TEMP = 1.0 / STUDENT_TEMP
INV_TEACHER_TEMP = 1.0 / TEACHER_TEMP


# --------------------------------------------------------------------------- #
# Generation-aware VMEM budgeting                                             #
# --------------------------------------------------------------------------- #
def _vmem_capacity_bytes():
    try:
        info = pltpu.get_tpu_info()
        cap = getattr(info, "vmem_capacity_bytes", None)
        if cap:
            return int(cap)
    except Exception:
        pass
    return 64 * 1024 * 1024  # conservative default (v7x-sized)


def _vmem_limit_bytes():
    # ~3/4 of physical VMEM, capped at 96 MiB: 96 MiB on v5e/v6e (128 MiB
    # physical), ~48 MiB on v7x (64 MiB physical).  Leaves double-buffering
    # headroom everywhere.
    return int(min(96 * 1024 * 1024, (_vmem_capacity_bytes() * 3) // 4))


def _row_align(itemsize):
    # Packed sublane tile: 8 rows for f32, 16 for bf16, 32 for int8/fp8.
    return max(8, 32 // int(itemsize))


def _choose_block_b(B, D, itemsize, budget):
    """Largest B-tile (packed-sublane aligned, divisor of B) fitting `budget`."""
    align = _row_align(itemsize)
    if B < align or B % align != 0:
        return B  # one full-batch block is always layout-legal
    # Pass-2 working set per row: 4 double-buffered logit inputs at native
    # dtype + ~6 live (tb, D) f32 intermediates.
    per_row = D * (2 * 4 * itemsize + 6 * 4)
    bb = min(int(budget // per_row), B)
    bb = (bb // align) * align
    while bb > 0 and B % bb != 0:
        bb -= align
    return bb if bb >= align else B


def _fused_fits(B, D, itemsize, budget):
    # 4 full logit arrays (double-buffer-counted) + ~8 live full f32 temps.
    need = B * D * (2 * 4 * itemsize + 8 * 4) + 16 * D * 4
    return need <= budget


# --------------------------------------------------------------------------- #
# Fused single-invocation path (whole problem resident in VMEM)               #
# --------------------------------------------------------------------------- #
def _temi_loss_fused(s1, s2, t1, t2, pk, vmem_limit):
    B, D = s1.shape
    itemsize = jnp.dtype(s1.dtype).itemsize

    def fused_kernel(pk_ref, s1_ref, s2_ref, t1_ref, t2_ref,
                     pk_out_ref, part_ref):
        def teacher(ref):
            z = ref[...].astype(jnp.float32) * INV_TEACHER_TEMP
            z = z - jnp.max(z, axis=-1, keepdims=True)
            e = jnp.exp(z)
            r = jnp.sum(e, axis=-1, keepdims=True)            # (B, 1)
            return z, e, r

        zt1, et1, rt1 = teacher(t1_ref)
        zt2, et2, rt2 = teacher(t2_ref)
        inv_rt1 = pl.reciprocal(rt1)    # O(B) exact reciprocals
        inv_rt2 = pl.reciprocal(rt2)

        # batch_pk = mean over the 2B teacher-softmax rows; momentum update.
        colsum = (jnp.sum(et1 * inv_rt1, axis=0, keepdims=True)
                  + jnp.sum(et2 * inv_rt2, axis=0, keepdims=True))
        batch_pk = colsum * (1.0 / (2.0 * B))
        pk_new = (pk_ref[...].astype(jnp.float32) * MOMENTUM
                  + batch_pk * (1.0 - MOMENTUM))
        pk_out_ref[...] = pk_new
        log_pk = jnp.log(pk_new)

        # sim_weight straight from the unnormalized exps (gamma == 1 path).
        if GAMMA == 1.0:
            weight = (jnp.sum(et1 * et2, axis=-1, keepdims=True)
                      * (inv_rt1 * inv_rt2))
        else:
            weight = jnp.sum(((et1 * inv_rt1) * (et2 * inv_rt2)) ** GAMMA,
                             axis=-1, keepdims=True)
        # et1/et2 are dead past this point; only zt1/zt2 + row stats stay live.

        log_rt1 = jnp.log(rt1)
        log_rt2 = jnp.log(rt2)

        def student(ref):
            z = ref[...].astype(jnp.float32) * INV_STUDENT_TEMP
            z = z - jnp.max(z, axis=-1, keepdims=True)
            r = jnp.sum(jnp.exp(z), axis=-1, keepdims=True)
            return z, jnp.log(r)

        # beta-MI with row constants factored out of the exponent.
        zs1, log_rs1 = student(s1_ref)
        inner1 = jnp.sum(jnp.exp(BETA * (zs1 + zt2) - log_pk),
                         axis=-1, keepdims=True)
        loss1 = BETA * (log_rs1 + log_rt2) - jnp.log(inner1)

        zs2, log_rs2 = student(s2_ref)
        inner2 = jnp.sum(jnp.exp(BETA * (zs2 + zt1) - log_pk),
                         axis=-1, keepdims=True)
        loss2 = BETA * (log_rs2 + log_rt1) - jnp.log(inner2)

        partial = jnp.sum(weight * (loss1 + loss2) * 0.5)
        part_ref[...] = jnp.full(part_ref.shape, partial, dtype=jnp.float32)

    full = lambda: pl.BlockSpec((B, D), lambda i: (0, 0))
    pk_new, part = pl.pallas_call(
        fused_kernel,
        grid=(1,),
        in_specs=[pl.BlockSpec((1, D), lambda i: (0, 0)),
                  full(), full(), full(), full()],
        out_specs=(pl.BlockSpec((1, D), lambda i: (0, 0)),
                   pl.BlockSpec((8, 128), lambda i: (0, 0))),
        out_shape=(jax.ShapeDtypeStruct((1, D), jnp.float32),
                   jax.ShapeDtypeStruct((8, 128), jnp.float32)),
        compiler_params=pltpu.CompilerParams(
            dimension_semantics=("arbitrary",),
            vmem_limit_bytes=vmem_limit),
        cost_estimate=pl.CostEstimate(
            flops=int(22 * B * D),
            transcendentals=int(8 * B * D),
            bytes_accessed=int(4 * B * D * itemsize + 2 * D * 4 + 8 * 128 * 4)),
    )(pk, s1, s2, t1, t2)

    return part[0, 0] * (1.0 / B), pk_new


# --------------------------------------------------------------------------- #
# Two-pass tiled path (large B*D)                                             #
# --------------------------------------------------------------------------- #
def _temi_loss_two_pass(s1, s2, t1, t2, pk, block_b, vmem_limit):
    B, D = s1.shape
    itemsize = jnp.dtype(s1.dtype).itemsize
    assert B % block_b == 0, (B, block_b)
    nb = B // block_b
    ncores = 2 if (nb % 2 == 0 and nb >= 2) else 1
    npc = nb // ncores  # reduction steps per core

    # ---- Pass 1: per-core batch_pk partials (megacores on v7x) ------------ #
    def pk_kernel(t1_ref, t2_ref, acc_ref):
        @pl.when(pl.program_id(1) == 0)
        def _init():
            acc_ref[...] = jnp.zeros_like(acc_ref)

        def colsum(ref):
            z = ref[...].astype(jnp.float32) * INV_TEACHER_TEMP
            z = z - jnp.max(z, axis=-1, keepdims=True)
            e = jnp.exp(z)
            r = jnp.sum(e, axis=-1, keepdims=True)                    # (tb, 1)
            return jnp.sum(e * pl.reciprocal(r), axis=0, keepdims=True)  # (1, D)

        acc_ref[...] += colsum(t1_ref) + colsum(t2_ref)

    row_map = lambda c, i: (c * npc + i, 0)
    pk_partials = pl.pallas_call(
        pk_kernel,
        grid=(ncores, npc),
        in_specs=[pl.BlockSpec((block_b, D), row_map),
                  pl.BlockSpec((block_b, D), row_map)],
        out_specs=pl.BlockSpec((None, 1, D), lambda c, i: (c, 0, 0)),
        out_shape=jax.ShapeDtypeStruct((ncores, 1, D), jnp.float32),
        compiler_params=pltpu.CompilerParams(
            dimension_semantics=("parallel", "arbitrary"),
            vmem_limit_bytes=vmem_limit),
        cost_estimate=pl.CostEstimate(
            flops=int(8 * B * D),
            transcendentals=int(2 * B * D),
            bytes_accessed=int(2 * B * D * itemsize + ncores * D * 4)),
    )(t1, t2)

    # Tiny (1, D) finalization in JAX: cross-core sum, momentum, log(pk_new).
    batch_pk = jnp.sum(pk_partials, axis=0) * (1.0 / (2.0 * B))       # (1, D)
    pk_new = pk.astype(jnp.float32) * MOMENTUM + batch_pk * (1.0 - MOMENTUM)
    log_pk = jnp.log(pk_new)   # hoisted out of the pass-2 hot loop

    # ---- Pass 2: per-tile partial loss sums ("parallel" across TCs) ------- #
    def loss_kernel(logpk_ref, s1_ref, s2_ref, t1_ref, t2_ref, part_ref):
        log_pk_v = logpk_ref[...]                                      # (1, D)

        def teacher(ref):
            z = ref[...].astype(jnp.float32) * INV_TEACHER_TEMP
            z = z - jnp.max(z, axis=-1, keepdims=True)
            e = jnp.exp(z)
            r = jnp.sum(e, axis=-1, keepdims=True)
            return z, e, r

        zt1, et1, rt1 = teacher(t1_ref)
        zt2, et2, rt2 = teacher(t2_ref)

        # sim_weight from unnormalized exps; teacher probs never materialized.
        if GAMMA == 1.0:
            weight = jnp.sum(et1 * et2, axis=-1, keepdims=True) / (rt1 * rt2)
        else:
            weight = jnp.sum(((et1 * pl.reciprocal(rt1))
                              * (et2 * pl.reciprocal(rt2))) ** GAMMA,
                             axis=-1, keepdims=True)
        # et1/et2 dead past here; only zt1/zt2 + row stats stay live.

        log_rt1 = jnp.log(rt1)
        log_rt2 = jnp.log(rt2)

        def student(ref):
            z = ref[...].astype(jnp.float32) * INV_STUDENT_TEMP
            z = z - jnp.max(z, axis=-1, keepdims=True)
            r = jnp.sum(jnp.exp(z), axis=-1, keepdims=True)
            return z, jnp.log(r)

        # -log sum_d (sp*tp)^beta / pk
        #   = beta*(log r_s + log r_t) - log sum_d exp(beta*(z_s+z_t) - log pk)
        zs1, log_rs1 = student(s1_ref)
        inner1 = jnp.sum(jnp.exp(BETA * (zs1 + zt2) - log_pk_v),
                         axis=-1, keepdims=True)
        loss1 = BETA * (log_rs1 + log_rt2) - jnp.log(inner1)

        zs2, log_rs2 = student(s2_ref)
        inner2 = jnp.sum(jnp.exp(BETA * (zs2 + zt1) - log_pk_v),
                         axis=-1, keepdims=True)
        loss2 = BETA * (log_rs2 + log_rt1) - jnp.log(inner2)

        partial = jnp.sum(weight * (loss1 + loss2) * 0.5)
        # Lane-dense (8,128) write; the tiny cross-tile reduce happens in JAX.
        part_ref[...] = jnp.full(part_ref.shape, partial, dtype=jnp.float32)

    tile = lambda: pl.BlockSpec((block_b, D), lambda i: (i, 0))
    partials = pl.pallas_call(
        loss_kernel,
        grid=(nb,),
        in_specs=[pl.BlockSpec((1, D), lambda i: (0, 0)),
                  tile(), tile(), tile(), tile()],
        out_specs=pl.BlockSpec((1, 8, 128), lambda i: (i, 0, 0)),
        out_shape=jax.ShapeDtypeStruct((nb, 8, 128), jnp.float32),
        compiler_params=pltpu.CompilerParams(
            dimension_semantics=("parallel",),
            vmem_limit_bytes=vmem_limit),
        cost_estimate=pl.CostEstimate(
            flops=int(16 * B * D),
            transcendentals=int(6 * B * D),
            bytes_accessed=int(4 * B * D * itemsize + D * 4 + nb * 8 * 128 * 4)),
    )(log_pk, s1, s2, t1, t2)

    loss = jnp.sum(partials[:, 0, 0]) * (1.0 / B)
    return loss, pk_new


# --------------------------------------------------------------------------- #
# Public entry point                                                          #
# --------------------------------------------------------------------------- #
def temi_loss(s1, s2, t1, t2, pk, *, block_b=None, fused=None):
    """Returns (scalar_loss, momentum-updated pk) matching TEMILoss.forward."""
    B, D = s1.shape
    itemsize = jnp.dtype(s1.dtype).itemsize
    vmem_limit = _vmem_limit_bytes()
    budget = (vmem_limit * 3) // 4

    if fused is None:
        fused = (block_b is None) and _fused_fits(B, D, itemsize, budget)
    if fused:
        return _temi_loss_fused(s1, s2, t1, t2, pk, vmem_limit)

    if block_b is None:
        block_b = _choose_block_b(B, D, itemsize, budget)
    return _temi_loss_two_pass(s1, s2, t1, t2, pk, block_b, vmem_limit)


def temi_loss_ref(s1, s2, t1, t2, pk):
    """Pure-JAX reference mirroring the PyTorch module (computed in f32)."""
    f = lambda x: x.astype(jnp.float32)
    sp1 = jax.nn.softmax(f(s1) * INV_STUDENT_TEMP, axis=-1)
    sp2 = jax.nn.softmax(f(s2) * INV_STUDENT_TEMP, axis=-1)
    tp1 = jax.nn.softmax(f(t1) * INV_TEACHER_TEMP, axis=-1)
    tp2 = jax.nn.softmax(f(t2) * INV_TEACHER_TEMP, axis=-1)
    batch_pk = jnp.mean(jnp.concatenate([tp1, tp2], axis=0), axis=0,
                        keepdims=True)
    pk_new = pk * MOMENTUM + batch_pk * (1.0 - MOMENTUM)
    weight = jnp.sum((tp1 * tp2) ** GAMMA, axis=-1)
    loss1 = -jnp.log(jnp.sum((sp1 * tp2) ** BETA / pk_new, axis=-1))
    loss2 = -jnp.log(jnp.sum((sp2 * tp1) ** BETA / pk_new, axis=-1))
    return jnp.mean(weight * (loss1 + loss2) / 2.0), pk_new


if __name__ == "__main__":
    B, D = 16, 256  # batch, out_dim (out_dim on the lane axis)

    key = jax.random.PRNGKey(0)
    kb, k1, k2, k3, k4 = jax.random.split(key, 5)
    base = jax.random.normal(kb, (B, D), dtype=jnp.float32)
    mk = lambda k: base + 0.3 * jax.random.normal(k, (B, D), dtype=jnp.float32)
    s1, s2, t1, t2 = mk(k1), mk(k2), mk(k3), mk(k4)
    # register_buffer('pk', ones(1, out_dim) / out_dim)
    pk0 = jnp.ones((1, D), dtype=jnp.float32) / D

    # 1) f32, forced two-pass with two B-tiles: exercises the per-core-partial
    #    pass-1 accumulator ((parallel, arbitrary) grid) and parallel pass 2.
    loss, pk_new = temi_loss(s1, s2, t1, t2, pk0, block_b=8, fused=False)
    jax.block_until_ready((loss, pk_new))
    loss_r, pk_r = temi_loss_ref(s1, s2, t1, t2, pk0)
    assert jnp.allclose(loss, loss_r, rtol=5e-4, atol=1e-5), (loss, loss_r)
    assert jnp.allclose(pk_new, pk_r, rtol=1e-5, atol=1e-7)

    # 2) bf16 logits (halves dominant HBM traffic), auto dispatch -> fused
    #    single-invocation kernel (everything VMEM-resident).
    s1b, s2b, t1b, t2b = (x.astype(jnp.bfloat16) for x in (s1, s2, t1, t2))
    loss_b, pk_b = temi_loss(s1b, s2b, t1b, t2b, pk0)
    jax.block_until_ready((loss_b, pk_b))
    loss_br, pk_br = temi_loss_ref(s1b, s2b, t1b, t2b, pk0)
    assert jnp.allclose(loss_b, loss_br, rtol=2e-3, atol=1e-5), (loss_b, loss_br)
    assert jnp.allclose(pk_b, pk_br, rtol=1e-4, atol=1e-6)

    # 3) bf16, forced two-pass with auto (bf16-aligned) tile: single-tile grid.
    loss_c, pk_c = temi_loss(s1b, s2b, t1b, t2b, pk0, fused=False)
    jax.block_until_ready((loss_c, pk_c))
    assert jnp.allclose(loss_c, loss_br, rtol=2e-3, atol=1e-5), (loss_c, loss_br)
    assert jnp.allclose(pk_c, pk_br, rtol=1e-4, atol=1e-6)

    print("KERNEL_OK")
</pallas_src>

<mosaic_0001>
module attributes {stable_mosaic.version = 11 : i64} {
  func.func @pk_kernel(%arg0: i32, %arg1: i32, %arg2: memref<8x256xf32, #tpu.memory_space<vmem>>, %arg3: memref<8x256xf32, #tpu.memory_space<vmem>>, %arg4: memref<1x1x256xf32, #tpu.memory_space<vmem>>) attributes {dimension_semantics = [#tpu.dimension_semantics<parallel>, #tpu.dimension_semantics<arbitrary>], iteration_bounds = array<i64: 2, 1>, scalar_prefetch = 0 : i64, scratch_operands = 0 : i64, tpu.core_type = #tpu.core_type<tc>, window_params = [{transform_indices = @transform_0, window_bounds = array<i64: 8, 256>}, {transform_indices = @transform_1, window_bounds = array<i64: 8, 256>}, {transform_indices = @transform_2, window_bounds = array<i64: 1, 1, 256>}]} {
    %c0_i32 = arith.constant 0 : i32
    %0 = arith.cmpi eq, %arg1, %c0_i32 : i32
    %1 = arith.extui %0 : i1 to i32
    %c0_i32_0 = arith.constant 0 : i32
    %2 = arith.cmpi ne, %1, %c0_i32_0 : i32
    scf.if %2 {
      %cst_17 = arith.constant 0.000000e+00 : f32
      %40 = vector.broadcast %cst_17 : f32 to vector<1x256xf32>
      %c0_18 = arith.constant 0 : index
      %c0_19 = arith.constant 0 : index
      %c0_20 = arith.constant 0 : index
      %41 = vector.load %arg4[%c0_18, %c0_19, %c0_20] : memref<1x1x256xf32, #tpu.memory_space<vmem>>, vector<1x1x256xf32>
      %42 = vector.shape_cast %41 : vector<1x1x256xf32> to vector<1x256xf32>
      %43 = vector.shape_cast %40 : vector<1x256xf32> to vector<1x1x256xf32>
      tpu.vector_store %arg4[%c0_18, %c0_19, %c0_20], %43 {strides = array<i32>} : memref<1x1x256xf32, #tpu.memory_space<vmem>>, vector<1x1x256xf32>,
    } else {
    }
    %c0 = arith.constant 0 : index
    %c0_1 = arith.constant 0 : index
    %c0_2 = arith.constant 0 : index
    %3 = vector.load %arg4[%c0, %c0_1, %c0_2] : memref<1x1x256xf32, #tpu.memory_space<vmem>>, vector<1x1x256xf32>
    %4 = vector.shape_cast %3 : vector<1x1x256xf32> to vector<1x256xf32>
    %c0_3 = arith.constant 0 : index
    %c0_4 = arith.constant 0 : index
    %5 = vector.load %arg2[%c0_3, %c0_4] : memref<8x256xf32, #tpu.memory_space<vmem>>, vector<8x256xf32>
    %cst = arith.constant 2.500000e+01 : f32
    %6 = vector.broadcast %cst : f32 to vector<8x256xf32>
    %7 = arith.mulf %5, %6 : vector<8x256xf32>
    %cst_5 = arith.constant dense<0xFF800000> : vector<8xf32>
    %8 = vector.multi_reduction <maximumf>, %7, %cst_5 [1] : vector<8x256xf32> to vector<8xf32>
    %9 = vector.shape_cast %8 : vector<8xf32> to vector<8x1xf32>
    %10 = vector.broadcast %9 : vector<8x1xf32> to vector<8x256xf32>
    %11 = arith.subf %7, %10 : vector<8x256xf32>
    %12 = math.exp %11 : vector<8x256xf32>
    %cst_6 = arith.constant dense<0.000000e+00> : vector<8xf32>
    %13 = vector.multi_reduction <add>, %12, %cst_6 [1] : vector<8x256xf32> to vector<8xf32>
    %14 = vector.shape_cast %13 : vector<8xf32> to vector<8x1xf32>
    %15 = tpu.reciprocal %14 : vector<8x1xf32> -> vector<8x1xf32>
    %16 = vector.broadcast %15 : vector<8x1xf32> to vector<8x256xf32>
    %17 = arith.mulf %12, %16 : vector<8x256xf32>
    %cst_7 = arith.constant dense<0.000000e+00> : vector<256xf32>
    %18 = vector.multi_reduction <add>, %17, %cst_7 [0] : vector<8x256xf32> to vector<256xf32>
    %19 = vector.shape_cast %18 : vector<256xf32> to vector<1x256xf32>
    %c0_8 = arith.constant 0 : index
    %c0_9 = arith.constant 0 : index
    %20 = vector.load %arg3[%c0_8, %c0_9] : memref<8x256xf32, #tpu.memory_space<vmem>>, vector<8x256xf32>
    %cst_10 = arith.constant 2.500000e+01 : f32
    %21 = vector.broadcast %cst_10 : f32 to vector<8x256xf32>
    %22 = arith.mulf %20, %21 : vector<8x256xf32>
    %cst_11 = arith.constant dense<0xFF800000> : vector<8xf32>
    %23 = vector.multi_reduction <maximumf>, %22, %cst_11 [1] : vector<8x256xf32> to vector<8xf32>
    %24 = vector.shape_cast %23 : vector<8xf32> to vector<8x1xf32>
    %25 = vector.broadcast %24 : vector<8x1xf32> to vector<8x256xf32>
    %26 = arith.subf %22, %25 : vector<8x256xf32>
    %27 = math.exp %26 : vector<8x256xf32>
    %cst_12 = arith.constant dense<0.000000e+00> : vector<8xf32>
    %28 = vector.multi_reduction <add>, %27, %cst_12 [1] : vector<8x256xf32> to vector<8xf32>
    %29 = vector.shape_cast %28 : vector<8xf32> to vector<8x1xf32>
    %30 = tpu.reciprocal %29 : vector<8x1xf32> -> vector<8x1xf32>
    %31 = vector.broadcast %30 : vector<8x1xf32> to vector<8x256xf32>
    %32 = arith.mulf %27, %31 : vector<8x256xf32>
    %cst_13 = arith.constant dense<0.000000e+00> : vector<256xf32>
    %33 = vector.multi_reduction <add>, %32, %cst_13 [0] : vector<8x256xf32> to vector<256xf32>
    %34 = vector.shape_cast %33 : vector<256xf32> to vector<1x256xf32>
    %35 = arith.addf %19, %34 : vector<1x256xf32>
    %36 = arith.addf %4, %35 : vector<1x256xf32>
    %c0_14 = arith.constant 0 : index
    %c0_15 = arith.constant 0 : index
    %c0_16 = arith.constant 0 : index
    %37 = vector.load %arg4[%c0_14, %c0_15, %c0_16] : memref<1x1x256xf32, #tpu.memory_space<vmem>>, vector<1x1x256xf32>
    %38 = vector.shape_cast %37 : vector<1x1x256xf32> to vector<1x256xf32>
    %39 = vector.shape_cast %36 : vector<1x256xf32> to vector<1x1x256xf32>
    tpu.vector_store %arg4[%c0_14, %c0_15, %c0_16], %39 {strides = array<i32>} : memref<1x1x256xf32, #tpu.memory_space<vmem>>, vector<1x1x256xf32>,
    return
  }
  func.func @transform_0(%arg0: i32, %arg1: i32) -> (i32, i32) {
    %c1_i32 = arith.constant 1 : i32
    %0 = arith.muli %arg0, %c1_i32 : i32
    %1 = arith.addi %0, %arg1 : i32
    %c0_i32 = arith.constant 0 : i32
    %c0_i32_0 = arith.constant 0 : i32
    return %1, %c0_i32 : i32, i32
  }
  func.func @transform_1(%arg0: i32, %arg1: i32) -> (i32, i32) {
    %c1_i32 = arith.constant 1 : i32
    %0 = arith.muli %arg0, %c1_i32 : i32
    %1 = arith.addi %0, %arg1 : i32
    %c0_i32 = arith.constant 0 : i32
    %c0_i32_0 = arith.constant 0 : i32
    return %1, %c0_i32 : i32, i32
  }
  func.func @transform_2(%arg0: i32, %arg1: i32) -> (i32, i32, i32) {
    %c0_i32 = arith.constant 0 : i32
    %c0_i32_0 = arith.constant 0 : i32
    %c0_i32_1 = arith.constant 0 : i32
    return %arg0, %c0_i32, %c0_i32_0 : i32, i32, i32
  }
}

</mosaic_0001>

<llo_original>
// kernel: tpu_custom_call.1
$region0: #{tpu_custom_call.1}
  #allocation0 [shape = 'u32[]', space=smem, size = 0x4, offset = 0x4, fixed_abs, tag = 'smem constant byte address 0x4 - core index']
  #allocation1 [shape = 'u32[72,128]{1,0:T(1,128)}', space=vmem, size = 0x9000, scoped, tag = 'internal scratch']
  %s0 = inlined_call_operand.hbm [shape: f32[16,256], index: 0, kind: input, shape index: {}]
  %s1 = inlined_call_operand.hbm [shape: f32[16,256], index: 1, kind: input, shape index: {}]
  %s2 = inlined_call_operand.hbm [shape: f32[2,1,256], index: 2, kind: output, shape index: {}]
  %s3 = sld [smem:[#allocation0]]
  $region53: #{tpu_custom_call.1} parent=0
    _
  %s5 = ssub.s32 1, %s3
  %s6 = scalar_select 0, %s5, %s3
  $region1: #{tpu_custom_call.1} parent=0
    #allocation2 [shape = 'u8[16384]{0}', space=vmem, size = 0x4000, scoped, tag = 'input window, operand 0']
    #allocation3 [shape = 's32[2]{0}', space=sflag, size = 0x8, scoped, tag = 'scoped memory for tpu_custom_call.1']
    #allocation4 [shape = 's32[2]{0}', space=sflag, size = 0x8, scoped, tag = 'scoped memory for tpu_custom_call.1']
    #allocation5 [shape = 'u8[16384]{0}', space=vmem, size = 0x4000, scoped, tag = 'input window, operand 1']
    #allocation6 [shape = 's32[2]{0}', space=sflag, size = 0x8, scoped, tag = 'scoped memory for tpu_custom_call.1']
    #allocation7 [shape = 'u8[2048]{0}', space=vmem, size = 0x800, scoped, tag = 'output window, operand 0']
    %7 = vsyncpa [#allocation3], 0
    %s8 = scalar_lea.sflag [#allocation3], 1
    %9 = vsyncpa %s8, 0
    %10 = vsyncpa [#allocation6], 0
    %s11 = scalar_lea.sflag [#allocation6], 1
    %12 = vsyncpa %s11, 0
    %13 = vsyncpa [#allocation4], 0
    %s14 = scalar_lea.sflag [#allocation4], 1
    %15 = vsyncpa %s14, 0
    loop: start=0, step=1, limit=4
    $region2: #{tpu_custom_call.1} parent=1 // loop_pre_header
      _
    $region3: #{tpu_custom_call.1} parent=1 // loop_header
      %s17 = sphi 0, %s21
      %p18 = scmp.ge.s32.totalorder %s17, 4
      %s24 = sphi 0, %s36
      %s25 = sphi 0, %s32
      %s26 = sphi 0, %s24
      %s27 = sphi 0, %s25
      %s28 = sphi 0, %s26
      %s29 = sphi 0, %s27
      %s41 = sphi 0, %s43
      %s44 = sphi 0, %s41
      %s45 = sphi 0, %s44
      %s61 = sphi 0, %s45
      %s69 = sphi 0, %s71
      %s72 = sphi 0, %s69
      %s73 = sphi 0, %s72
      %s89 = sphi 0, %s73
      %s95 = sphi 0, %s97
      %s98 = sphi 0, %s95
      %s99 = sphi 0, %s98
      %s115 = sphi 0, %s99
    $region4: #{tpu_custom_call.1} parent=1 // loop_header_branch
      %20 = sbr.rel (%p18) target = $region8
    $region5: #{tpu_custom_call.1} parent=1 // loop_body
      %s22 = ssub.s32 %s17, 1
      %s23 = ssub.s32 %s17, 2
      %s30 = sadd.s32 1, %s25
      %p31 = scmp.ge.s32.totalorder %s30, 1
      %s32 = scalar_select %p31, 0, %s30
      %s33 = sadd.s32 1, %s24
      %s34 = scalar_select %p31, %s33, %s24
      %p35 = scmp.ge.s32.totalorder %s34, 2
      %s36 = scalar_select %p35, 0, %s34
      %s37 = sadd.s32 %s24, %s25
      %s38 = sadd.s32 %s36, %s32
      %s39 = ssub.s32 %s37, %s38
      %p40 = scmp.eq.s32.totalorder %s39, 0
      %s42 = sadd.s32 %s41, 1
      %s43 = scalar_select %p40, %s41, %s42
      %p46 = pneg %p40
      %p47 = scmp.eq.s32.totalorder %s17, 1
      %p48 = por %p46, %p47
      %p49 = scmp.ne.s32.totalorder %s41, %s44
      %p50 = scmp.eq.s32.totalorder %s17, 0
      %p51 = por %p49, %p50
      %p52 = scmp.ne.s32.totalorder %s41, %s44
      %p53 = scmp.eq.s32.totalorder %s22, 1
      %p54 = por %p52, %p53
      %p55 = scmp.ne.s32.totalorder %s44, %s45
      %p56 = scmp.eq.s32.totalorder %s22, 0
      %p57 = por %p55, %p56
      %p58 = scmp.ne.s32.totalorder %s44, %s45
      %p59 = scmp.eq.s32.totalorder %s23, 1
      %p60 = por %p58, %p59
      %p62 = scmp.ne.s32.totalorder %s45, %s61
      %p63 = scmp.eq.s32.totalorder %s23, 0
      %p64 = por %p62, %p63
      %s65 = sadd.s32 %s24, %s25
      %s66 = sadd.s32 %s36, %s32
      %s67 = ssub.s32 %s65, %s66
      %p68 = scmp.eq.s32.totalorder %s67, 0
      %s70 = sadd.s32 %s69, 1
      %s71 = scalar_select %p68, %s69, %s70
      %p74 = pneg %p68
      %p75 = scmp.eq.s32.totalorder %s17, 1
      %p76 = por %p74, %p75
      %p77 = scmp.ne.s32.totalorder %s69, %s72
      %p78 = scmp.eq.s32.totalorder %s17, 0
      %p79 = por %p77, %p78
      %p80 = scmp.ne.s32.totalorder %s69, %s72
      %p81 = scmp.eq.s32.totalorder %s22, 1
      %p82 = por %p80, %p81
      %p83 = scmp.ne.s32.totalorder %s72, %s73
      %p84 = scmp.eq.s32.totalorder %s22, 0
      %p85 = por %p83, %p84
      %p86 = scmp.ne.s32.totalorder %s72, %s73
      %p87 = scmp.eq.s32.totalorder %s23, 1
      %p88 = por %p86, %p87
      %p90 = scmp.ne.s32.totalorder %s73, %s89
      %p91 = scmp.eq.s32.totalorder %s23, 0
      %p92 = por %p90, %p91
      %s93 = ssub.s32 %s24, %s36
      %p94 = scmp.eq.s32.totalorder %s93, 0
      %s96 = sadd.s32 %s95, 1
      %s97 = scalar_select %p94, %s95, %s96
      %p100 = pneg %p94
      %p101 = scmp.eq.s32.totalorder %s17, 1
      %p102 = por %p100, %p101
      %p103 = scmp.ne.s32.totalorder %s95, %s98
      %p104 = scmp.eq.s32.totalorder %s17, 0
      %p105 = por %p103, %p104
      %p106 = scmp.ne.s32.totalorder %s95, %s98
      %p107 = scmp.eq.s32.totalorder %s22, 1
      %p108 = por %p106, %p107
      %p109 = scmp.ne.s32.totalorder %s98, %s99
      %p110 = scmp.eq.s32.totalorder %s22, 0
      %p111 = por %p109, %p110
      %p112 = scmp.ne.s32.totalorder %s98, %s99
      %p113 = scmp.eq.s32.totalorder %s23, 1
      %p114 = por %p112, %p113
      %p116 = scmp.ne.s32.totalorder %s99, %s115
      %p117 = scmp.eq.s32.totalorder %s23, 0
      %p118 = por %p116, %p117
      %p119 = scmp.le.s32.totalorder 1, %s17
      %p120 = scmp.lt.s32.totalorder %s17, 3
      %p121 = pnand %p119, %p120
      %p122 = pneg %p121
      // Predicated region
      $region9: #{tpu_custom_call.1} parent=5 // pred_check
        _
      $region10: #{tpu_custom_call.1} parent=5 // pred_check_branch
        %124 = sbr.rel (%p121) target = $region12
      $region11: #{tpu_custom_call.1} parent=5 // pred_region
        %s125 = ssub.s32 %s17, 1
      $region12: #{tpu_custom_call.1} parent=5 // pred_fallthru
        _
      %p126 = scmp.lt.s32.totalorder %s17, 2
      // Predicated region
      $region13: #{tpu_custom_call.1} parent=5 // pred_check
        %p127 = pneg %p126
      $region14: #{tpu_custom_call.1} parent=5 // pred_check_branch
        %129 = sbr.rel (%p127) target = $region16
      $region15: #{tpu_custom_call.1} parent=5 // pred_region
        // Predicated region
        $region17: #{tpu_custom_call.1} parent=15 // pred_check
          %p130 = pneg %p51
        $region18: #{tpu_custom_call.1} parent=15 // pred_check_branch
          %132 = sbr.rel (%p130) target = $region20
        $region19: #{tpu_custom_call.1} parent=15 // pred_region
          %s133 = sand.u32 %s41, 1
          %s134 = scalar_lea.sflag [#allocation3], %s133
          %s135 = sand.u32 %s41, 1
          %s136 = smul.addr %s135, 16
          %s137 = scalar_lea.vmem [#allocation2], %s136
          %s138 = sadd.s32 %s24, %s25
          %140 = vsyncadd %s134, 0
          %s141 = smul.addr %s138, 2
          %s142 = smul.addr %s141, 8
          %s143 = scalar_lea.hbm %s0, %s142
          %s145 = sshll.u32 %s143, 4
          %s146 = int_to_ptr.hbm [resolvable:$true] %s145
          %s147 = sshll.u32 %s137, 4
          %s148 = int_to_ptr.vmem [resolvable:$true] %s147
          %150 = dma.hbm_to_vmem [thread:$0]  %s146, 256, %s148, %s134
        $region20: #{tpu_custom_call.1} parent=15 // pred_fallthru
          _
        // Predicated region
        $region21: #{tpu_custom_call.1} parent=15 // pred_check
          %p151 = pneg %p79
        $region22: #{tpu_custom_call.1} parent=15 // pred_check_branch
          %153 = sbr.rel (%p151) target = $region24
        $region23: #{tpu_custom_call.1} parent=15 // pred_region
          %s154 = sand.u32 %s69, 1
          %s155 = scalar_lea.sflag [#allocation6], %s154
          %s156 = sand.u32 %s69, 1
          %s157 = smul.addr %s156, 16
          %s158 = scalar_lea.vmem [#allocation5], %s157
          %s159 = sadd.s32 %s24, %s25
          %161 = vsyncadd %s155, 0
          %s162 = smul.addr %s159, 2
          %s163 = smul.addr %s162, 8
          %s164 = scalar_lea.hbm %s1, %s163
          %s166 = sshll.u32 %s164, 4
          %s167 = int_to_ptr.hbm [resolvable:$true] %s166
          %s168 = sshll.u32 %s158, 4
          %s169 = int_to_ptr.vmem [resolvable:$true] %s168
          %171 = dma.hbm_to_vmem [thread:$0]  %s167, 256, %s169, %s155
        $region24: #{tpu_custom_call.1} parent=15 // pred_fallthru
          _
      $region16: #{tpu_custom_call.1} parent=5 // pred_fallthru
        _
      %p172 = scmp.le.s32.totalorder 1, %s17
      %p173 = scmp.lt.s32.totalorder %s17, 3
      %p174 = pnand %p172, %p173
      %p175 = pneg %p174
      // Predicated region
      $region25: #{tpu_custom_call.1} parent=5 // pred_check
        _
      $region26: #{tpu_custom_call.1} parent=5 // pred_check_branch
        %177 = sbr.rel (%p174) target = $region28
      $region27: #{tpu_custom_call.1} parent=5 // pred_region
        %s178 = ssub.s32 %s17, 1
        %s179 = sand.u32 %s44, 1
        %s180 = scalar_lea.sflag [#allocation3], %s179
        %s181 = sand.u32 %s44, 1
        %s182 = smul.addr %s181, 16
        %s183 = scalar_lea.vmem [#allocation2], %s182
        // Predicated region
        $region29: #{tpu_custom_call.1} parent=27 // pred_check
          %p184 = pneg %p57
        $region30: #{tpu_custom_call.1} parent=27 // pred_check_branch
          %186 = sbr.rel (%p184) target = $region32
        $region31: #{tpu_custom_call.1} parent=27 // pred_region
          %188 = dma.done %s180, 256
        $region32: #{tpu_custom_call.1} parent=27 // pred_fallthru
          _
        %s189 = sand.u32 %s72, 1
        %s190 = scalar_lea.sflag [#allocation6], %s189
        %s191 = sand.u32 %s72, 1
        %s192 = smul.addr %s191, 16
        %s193 = scalar_lea.vmem [#allocation5], %s192
        // Predicated region
        $region33: #{tpu_custom_call.1} parent=27 // pred_check
          %p194 = pneg %p85
        $region34: #{tpu_custom_call.1} parent=27 // pred_check_branch
          %196 = sbr.rel (%p194) target = $region36
        $region35: #{tpu_custom_call.1} parent=27 // pred_region
          %198 = dma.done %s190, 256
        $region36: #{tpu_custom_call.1} parent=27 // pred_fallthru
          _
        %s199 = sand.u32 %s44, 1
        %s200 = scalar_lea.sflag [#allocation3], %s199
        %s201 = sand.u32 %s44, 1
        %s202 = smul.addr %s201, 16
        %s203 = scalar_lea.vmem [#allocation2], %s202
        %p204 = pneg %p57
        %p205 = pneg %p54
        %s206 = sand.u32 %s72, 1
        %s207 = scalar_lea.sflag [#allocation6], %s206
        %s208 = sand.u32 %s72, 1
        %s209 = smul.addr %s208, 16
        %s210 = scalar_lea.vmem [#allocation5], %s209
        %p211 = pneg %p85
        %p212 = pneg %p82
        %p213 = pneg %p111
        %p214 = pneg %p108
        %s215 = sand.u32 %s98, 1
        %s216 = scalar_lea.sflag [#allocation4], %s215
        %s217 = sand.u32 %s98, 1
        %s218 = smul.addr %s217, 2
        %s219 = scalar_lea.vmem [#allocation7], %s218
        %s220 = sadd.s32 %s26, %s27
        %s221 = sadd.s32 %s26, %s27
        %p222 = scmp.eq.s32.totalorder %s27, 0
        // Predicated region
        $region37: #{tpu_custom_call.1} parent=27 // pred_check
          %p223 = pneg %p222
        $region38: #{tpu_custom_call.1} parent=27 // pred_check_branch
          %225 = sbr.rel (%p223) target = $region40
        $region39: #{tpu_custom_call.1} parent=27 // pred_region
          %v226 = vlaneseq
          %vm227 = vcmp.ge.s32.totalorder %v226, 0
          %vm228 = vcmp.lt.s32.totalorder %v226, 256
          %vm229 = vmand %vm227, %vm228
          %230 = vst.msk [vmem:[%s219] sm:$0x3] %vm229, 0.0
        $region40: #{tpu_custom_call.1} parent=27 // pred_fallthru
          _
        %v231 = vld [vmem:[%s219] sm:$0x3]
        %v232 = vld [vmem:[%s183] sm:$0xff]
        %v233 = vld [vmem:[%s183 + $0x8] sm:$0xff]
        %v234 = vmul.f32 %v232, 25.0
        %v235 = vmul.f32 %v233, 25.0
        %v236 = vmax.f32 %v234, %v235
        %237 = vmax.xlane.f32.xlu0 %v236
        %v238 = vpop.xlane.xlu0 %237
        %v239 = vsub.f32 %v234, %v238
        %v240 = vsub.f32 %v235, %v238
        %v241 = vmul.f32 %v239, 1.442695
        %v242 = vpow.pop %v241
        %v243 = vmul.f32 %v240, 1.442695
        %v244 = vpow.pop %v243
        %v245 = vadd.f32 %v242, %v244
        %246 = vadd.xlane.f32.xlu0 %v245
        %v247 = vpop.xlane.xlu0 %246
        %v248 = vrcp.pop %v247
        %v249 = vmul.f32 %v247, %v248
        %v250 = vsub.f32 1.0, %v249
        %v251 = vmul.f32 %v248, %v250
        %v252 = vadd.f32 %v248, %v251
        %vm253 = vweird.f32 %v247
        %vm254 = vweird.f32 %v248
        %vm255 = vmor %vm253, %vm254
        %v256 = vsel %vm255, %v248, %v252
        %v257 = vand.u32 2147483647, %v247
        %vm258 = vcmp.eq.f32.partialorder %v257, 8.507059e+37
        %v259 = vand.u32 %v247, 2147483648
        %v260 = vor.u32 1.1754944e-38, %v259
        %v261 = vsel %vm258, %v260, %v256
        %v262 = vmul.f32 %v242, %v261
        %v263 = vmul.f32 %v244, %v261
        %v264 = vrot.slane %v262, 4
        %v265 = vadd.f32 %v262, %v264
        %v266 = vrot.slane %v265, 2
        %v267 = vadd.f32 %v265, %v266
        %v268 = vrot.slane %v267, 1
        %v269 = vadd.f32 %v267, %v268
        %v270 = vrot.slane %v263, 4
        %v271 = vadd.f32 %v263, %v270
        %v272 = vrot.slane %v271, 2
        %v273 = vadd.f32 %v271, %v272
        %v274 = vrot.slane %v273, 1
        %v275 = vadd.f32 %v273, %v274
        %v276 = vld [vmem:[%s193] sm:$0xff]
        %v277 = vld [vmem:[%s193 + $0x8] sm:$0xff]
        %v278 = vmul.f32 %v276, 25.0
        %v279 = vmul.f32 %v277, 25.0
        %v280 = vmax.f32 %v278, %v279
        %281 = vmax.xlane.f32.xlu0 %v280
        %v282 = vpop.xlane.xlu0 %281
        %v283 = vsub.f32 %v278, %v282
        %v284 = vsub.f32 %v279, %v282
        %v285 = vmul.f32 %v283, 1.442695
        %v286 = vpow.pop %v285
        %v287 = vmul.f32 %v284, 1.442695
        %v288 = vpow.pop %v287
        %v289 = vadd.f32 %v286, %v288
        %290 = vadd.xlane.f32.xlu0 %v289
        %v291 = vpop.xlane.xlu0 %290
        %v292 = vrcp.pop %v291
        %v293 = vmul.f32 %v291, %v292
        %v294 = vsub.f32 1.0, %v293
        %v295 = vmul.f32 %v292, %v294
        %v296 = vadd.f32 %v292, %v295
        %vm297 = vweird.f32 %v291
        %vm298 = vweird.f32 %v292
        %vm299 = vmor %vm297, %vm298
        %v300 = vsel %vm299, %v292, %v296
        %v301 = vand.u32 2147483647, %v291
        %vm302 = vcmp.eq.f32.partialorder %v301, 8.507059e+37
        %v303 = vand.u32 %v291, 2147483648
        %v304 = vor.u32 1.1754944e-38, %v303
        %v305 = vsel %vm302, %v304, %v300
        %v306 = vmul.f32 %v286, %v305
        %v307 = vmul.f32 %v288, %v305
        %v308 = vrot.slane %v306, 4
        %v309 = vadd.f32 %v306, %v308
        %v310 = vrot.slane %v309, 2
        %v311 = vadd.f32 %v309, %v310
        %v312 = vrot.slane %v311, 1
        %v313 = vadd.f32 %v311, %v312
        %v314 = vrot.slane %v307, 4
        %v315 = vadd.f32 %v307, %v314
        %v316 = vrot.slane %v315, 2
        %v317 = vadd.f32 %v315, %v316
        %v318 = vrot.slane %v317, 1
        %v319 = vadd.f32 %v317, %v318
        %v320 = vadd.f32 %v269, %v313
        %v321 = vadd.f32 %v275, %v319
        %v324 = vrot.slane %v321, 7
        %vm325 = vcmask 1040384
        %v326 = vsel %vm325, %v320, %v324
        %v328 = vadd.f32 %v231, %v326
        %v329 = vlaneseq
        %vm330 = vcmp.ge.s32.totalorder %v329, 0
        %vm331 = vcmp.lt.s32.totalorder %v329, 256
        %vm332 = vmand %vm330, %vm331
        %333 = vst.msk [vmem:[%s219] sm:$0x3] %vm332, %v328
        %s334 = sand.u32 %s98, 1
        %s335 = scalar_lea.sflag [#allocation4], %s334
        %s336 = sand.u32 %s98, 1
        %s337 = smul.addr %s336, 2
        %s338 = scalar_lea.vmem [#allocation7], %s337
        // Predicated region
        $region41: #{tpu_custom_call.1} parent=27 // pred_check
          %p339 = pneg %p108
        $region42: #{tpu_custom_call.1} parent=27 // pred_check_branch
          %341 = sbr.rel (%p339) target = $region44
        $region43: #{tpu_custom_call.1} parent=27 // pred_region
          %343 = vsyncadd %s335, 0
          %s344 = smul.addr %s26, 2
          %s345 = scalar_lea.hbm %s2, %s344
          %s347 = sshll.u32 %s338, 4
          %s348 = int_to_ptr.vmem [resolvable:$true] %s347
          %s349 = sshll.u32 %s345, 4
          %s350 = int_to_ptr.hbm [resolvable:$true] %s349
          %352 = dma.vmem_to_hbm [thread:$0]  %s348, 32, %s350, %s335
        $region44: #{tpu_custom_call.1} parent=27 // pred_fallthru
          _
      $region28: #{tpu_custom_call.1} parent=5 // pred_fallthru
        _
      %p353 = scmp.le.s32.totalorder 2, %s17
      // Predicated region
      $region45: #{tpu_custom_call.1} parent=5 // pred_check
        %p354 = pneg %p353
      $region46: #{tpu_custom_call.1} parent=5 // pred_check_branch
        %356 = sbr.rel (%p354) target = $region48
      $region47: #{tpu_custom_call.1} parent=5 // pred_region
        %s357 = ssub.s32 %s17, 2
        // Predicated region
        $region49: #{tpu_custom_call.1} parent=47 // pred_check
          %p358 = pneg %p114
        $region50: #{tpu_custom_call.1} parent=47 // pred_check_branch
          %360 = sbr.rel (%p358) target = $region52
        $region51: #{tpu_custom_call.1} parent=47 // pred_region
          %s361 = sand.u32 %s99, 1
          %s362 = scalar_lea.sflag [#allocation4], %s361
          %s363 = sand.u32 %s99, 1
          %s364 = smul.addr %s363, 2
          %s365 = scalar_lea.vmem [#allocation7], %s364
          %367 = dma.done %s362, 32
        $region52: #{tpu_custom_call.1} parent=47 // pred_fallthru
          _
      $region48: #{tpu_custom_call.1} parent=5 // pred_fallthru
        _
    $region6: #{tpu_custom_call.1} parent=1 // loop_footer
      %s21 = sadd.s32 1, %s17
    $region7: #{tpu_custom_call.1} parent=1 // loop_footer_branch
      %16 = sbr.rel target = $region3
    $region8: #{tpu_custom_call.1} parent=1 // loop_exit
      _
    %368 = vsyncpa [#allocation3], 1
    %s369 = scalar_lea.sflag [#allocation3], 1
    %370 = vsyncpa %s369, 1
    %371 = vsyncpa [#allocation6], 1
    %s372 = scalar_lea.sflag [#allocation6], 1
    %373 = vsyncpa %s372, 1
    %374 = vsyncpa [#allocation4], 1
    %s375 = scalar_lea.sflag [#allocation4], 1
    %376 = vsyncpa %s375, 1

</llo_original>
